<compile_context>
chip_gen: v7x
topology: tpu7x:2x2x1
jax: 0.10.0
libtpu: 0.0.40
codegen_flags: <defaults>
</compile_context>

<pallas_src>
import jax
import jax.numpy as jnp
from jax.experimental import pallas as pl
from jax.experimental.pallas import tpu as pltpu

LANES = 128
ACC_MAX_ROWS = 2048        # accumulator cap: (2048, 128) f32 = 1 MiB


def _gen_block_rows():
    """Per-generation row-block size (must be a multiple of ACC_MAX_ROWS)."""
    try:
        kind = jax.devices()[0].device_kind.lower()
    except Exception:
        kind = ""
    if "v7" in kind:
        return 4096        # 2 MiB / input block on v7x
    return 2048            # 1 MiB / input block: near HBM roofline on v5e/v6e


def _round_up(n, m):
    return ((n + m - 1) // m) * m


def _choose_tiling(rows, gen_block_rows):
    """Pick (block_rows, acc_rows) with block_rows % acc_rows == 0."""
    r8 = _round_up(rows, 8)
    if r8 <= ACC_MAX_ROWS:
        return r8, r8
    block = min(gen_block_rows, _round_up(r8, ACC_MAX_ROWS))
    return block, ACC_MAX_ROWS


def _to_lanes(x):
    """Flatten to an f32 lane-major (rows, 128) slab.

    The reshape is a free layout change when numel % 128 == 0.  A non-aligned
    tail forces a zero-pad copy; the pad is zero in BOTH operands so it
    contributes 0 to |d| and d*d and needs no extra masking.
    """
    # TODO(synk): avoid the O(N) pad copy for non-128-aligned streams by
    # streaming the flat array via memory_space=pl.ANY + manual DMA with a
    # lane mask on the final row.
    flat = jnp.real(x).astype(jnp.float32).reshape(-1)
    n = flat.shape[0]
    pad = (-n) % LANES
    if pad:
        flat = jnp.pad(flat, (0, pad))
    rows = flat.shape[0] // LANES
    return flat.reshape(rows, LANES), rows


def _make_idx_map(nbh, last_block):
    """Clamped row-block index map (core axis c, row-block step i)."""
    def idx_map(c, i):
        return (jnp.minimum(c * nbh + i, last_block), 0)
    return idx_map


def _make_loss_kernel(pair_meta):
    """Build the fused streaming-reduction kernel.

    pair_meta: tuple of dicts with static per-pair config:
        block_rows, acc_rows, nb, rows, do_abs, do_sq
    Kernel args: (o0, r0[, o1, r1], abs_out, sq_out, acc_abs, acc_sq).
    """
    n_pairs = len(pair_meta)

    def _accumulate(o_ref, r_ref, g, meta, acc_abs_ref, acc_sq_ref):
        block_rows = meta["block_rows"]
        acc_rows = meta["acc_rows"]
        nb = meta["nb"]
        rows = meta["rows"]
        n_chunks = block_rows // acc_rows
        has_partial = (rows % block_rows) != 0

        def add(masked):
            for ch in range(n_chunks):
                sl = pl.ds(ch * acc_rows, acc_rows)
                d = o_ref[sl, :] - r_ref[sl, :]
                if masked:
                    row = jax.lax.broadcasted_iota(
                        jnp.int32, (acc_rows, LANES), 0)
                    valid = (g * block_rows + ch * acc_rows + row) < rows
                    # Keep the select (NOT a mask-multiply): rows past the
                    # array extent hold unspecified data that may be NaN/Inf.
                    d = jnp.where(valid, d, 0.0)
                if meta["do_abs"]:
                    acc_abs_ref[...] += jnp.abs(d)
                if meta["do_sq"]:
                    acc_sq_ref[...] += d * d

        if has_partial:
            # Steady-state blocks stay on the unmasked path; the mask only
            # runs on the single partial final block of this stream.
            @pl.when(g < nb - 1)
            def _():
                add(False)

            @pl.when(g == nb - 1)
            def _():
                add(True)
        else:
            @pl.when(g < nb)
            def _():
                add(False)

    def kernel(*refs):
        in_refs = refs[:2 * n_pairs]
        abs_out_ref = refs[2 * n_pairs]
        sq_out_ref = refs[2 * n_pairs + 1]
        acc_abs_ref = refs[2 * n_pairs + 2]
        acc_sq_ref = refs[2 * n_pairs + 3]

        c = pl.program_id(0)              # TensorCore split ("parallel")
        i = pl.program_id(1)              # row-block step ("arbitrary")
        nbh = pl.num_programs(1)
        g = c * nbh + i                   # global row-block index

        @pl.when(i == 0)
        def _():
            acc_abs_ref[...] = jnp.zeros_like(acc_abs_ref)
            acc_sq_ref[...] = jnp.zeros_like(acc_sq_ref)

        for p in range(n_pairs):
            _accumulate(in_refs[2 * p], in_refs[2 * p + 1], g, pair_meta[p],
                        acc_abs_ref, acc_sq_ref)

        # Per-core epilogue: reduce sublanes once, emit a lane-dense (8,128)
        # block (partial sums in row 0, zeros elsewhere).
        @pl.when(i == nbh - 1)
        def _():
            sub = jax.lax.broadcasted_iota(jnp.int32, (8, LANES), 0)
            abs_out_ref[...] = jnp.where(
                sub == 0, jnp.sum(acc_abs_ref[...], axis=0, keepdims=True), 0.0)
            sq_out_ref[...] = jnp.where(
                sub == 0, jnp.sum(acc_sq_ref[...], axis=0, keepdims=True), 0.0)

    return kernel


def _reduce_streams(pairs):
    """Fused streaming reduction over one or two (out, ref) pairs.

    pairs: list of (out2d, ref2d, rows, do_abs, do_sq) with (rows,128) f32
    slabs.  Returns (sum_abs, sum_sq) f32 scalars.
    """
    gen_rows = _gen_block_rows()
    metas = []
    arrays = []
    for (o2d, r2d, rows, do_abs, do_sq) in pairs:
        block_rows, acc_rows = _choose_tiling(rows, gen_rows)
        metas.append(dict(block_rows=block_rows, acc_rows=acc_rows,
                          nb=pl.cdiv(rows, block_rows), rows=rows,
                          do_abs=do_abs, do_sq=do_sq))
        arrays += [o2d, r2d]

    nb = max(m["nb"] for m in metas)
    nbh = pl.cdiv(nb, 2)                  # row-blocks per core

    in_specs = []
    for m in metas:
        tile = pl.BlockSpec((m["block_rows"], LANES),
                            _make_idx_map(nbh, m["nb"] - 1))
        in_specs += [tile, tile]

    abs_rows = next((m["acc_rows"] for m in metas if m["do_abs"]), 8)
    sq_rows = next((m["acc_rows"] for m in metas if m["do_sq"]), 8)

    out_specs = (pl.BlockSpec((8, LANES), lambda c, i: (c, 0)),
                 pl.BlockSpec((8, LANES), lambda c, i: (c, 0)))

    abs_part, sq_part = pl.pallas_call(
        _make_loss_kernel(tuple(metas)),
        out_shape=(jax.ShapeDtypeStruct((16, LANES), jnp.float32),
                   jax.ShapeDtypeStruct((16, LANES), jnp.float32)),
        grid=(2, nbh),
        in_specs=in_specs,
        out_specs=out_specs,
        scratch_shapes=[pltpu.VMEM((abs_rows, LANES), jnp.float32),
                        pltpu.VMEM((sq_rows, LANES), jnp.float32)],
        compiler_params=pltpu.CompilerParams(
            dimension_semantics=("parallel", "arbitrary"),
            vmem_limit_bytes=32 * 1024 * 1024),
    )(*arrays)

    return jnp.sum(abs_part), jnp.sum(sq_part)


def loss_fun(dec_pred, dec_tar, weight, model_name):
    """Pallas re-implementation of LossFun.forward.

    Note: the torch code's `self.MdlNme.lower == 'lstm'` compares a bound
    method against a string (always False), so the first branch only fires for
    model_name.lower() == 'dnn'; we reproduce that behaviour.
    """
    w0 = jnp.asarray(weight[0], dtype=jnp.float32)
    w1 = jnp.asarray(weight[1], dtype=jnp.float32)

    if model_name.lower() == 'dnn':
        mo2d, m_rows = _to_lanes(dec_pred['mdloupt'])
        mr2d, _ = _to_lanes(dec_tar['modlRef'])
        wo2d, w_rows = _to_lanes(dec_pred['wavfout'])
        wr2d, _ = _to_lanes(dec_tar['wavfRef'])
        # One fused kernel: model pair -> L1 accumulator only, waveform pair
        # -> MSE accumulator only.
        sum_abs, sum_sq = _reduce_streams([
            (mo2d, mr2d, m_rows, True, False),
            (wo2d, wr2d, w_rows, False, True),
        ])
        n_abs = int(dec_pred['mdloupt'].size)
        n_sq = int(dec_pred['wavfout'].size)
    else:
        # Aliased branch: ModlOut/ModlRef ARE WavfOut/WavfRef — stream the
        # pair once and compute both reductions from a single pass.
        o2d, rows = _to_lanes(dec_pred['mdloupt'])
        r2d, _ = _to_lanes(dec_tar['modlRef'])
        sum_abs, sum_sq = _reduce_streams([(o2d, r2d, rows, True, True)])
        n_abs = n_sq = int(dec_pred['mdloupt'].size)

    f_loss = sum_abs / n_abs
    s_loss = sum_sq / n_sq
    t_loss = w0 * f_loss + w1 * s_loss
    return {'fullLoss': t_loss, 'wavfLoss': s_loss, 'moutLoss': f_loss}


if __name__ == "__main__":
    key = jax.random.PRNGKey(0)
    k1, k2, k3, k4 = jax.random.split(key, 4)

    # args.loss_wei = "0.7,0.3", args.model_name = "dnn"
    weight = (0.7, 0.3)

    # Waveform-like tensor (128-aligned element count) and a model-output
    # tensor whose size is deliberately NOT 128-aligned so the pad + partial
    # final-block masking paths are exercised.
    wavf_shape = (2, 4, 16, 16)   # 2048 elements
    modl_shape = (2, 3, 37)       # 222 elements

    dec_pred = {
        'wavfout': jax.random.normal(k1, wavf_shape, dtype=jnp.float32),
        'mdloupt': jax.random.normal(k2, modl_shape, dtype=jnp.float32),
    }
    dec_tar = {
        'wavfRef': jax.random.normal(k3, wavf_shape, dtype=jnp.float32),
        'modlRef': jax.random.normal(k4, modl_shape, dtype=jnp.float32),
    }

    # --- 'dnn' branch ---
    out = loss_fun(dec_pred, dec_tar, weight, "dnn")
    jax.block_until_ready(out)

    f_ref = jnp.mean(jnp.abs(dec_pred['mdloupt'] - dec_tar['modlRef']))
    s_ref = jnp.mean((dec_pred['wavfout'] - dec_tar['wavfRef']) ** 2)
    t_ref = weight[0] * f_ref + weight[1] * s_ref
    assert jnp.allclose(out['moutLoss'], f_ref, rtol=1e-5, atol=1e-6)
    assert jnp.allclose(out['wavfLoss'], s_ref, rtol=1e-5, atol=1e-6)
    assert jnp.allclose(out['fullLoss'], t_ref, rtol=1e-5, atol=1e-6)

    # --- aliased (non-'dnn') branch ---
    out2 = loss_fun(dec_pred, dec_tar, weight, "cnn")
    jax.block_until_ready(out2)

    d = dec_pred['mdloupt'] - dec_tar['modlRef']
    f_ref2 = jnp.mean(jnp.abs(d))
    s_ref2 = jnp.mean(d * d)
    t_ref2 = weight[0] * f_ref2 + weight[1] * s_ref2
    assert jnp.allclose(out2['moutLoss'], f_ref2, rtol=1e-5, atol=1e-6)
    assert jnp.allclose(out2['wavfLoss'], s_ref2, rtol=1e-5, atol=1e-6)
    assert jnp.allclose(out2['fullLoss'], t_ref2, rtol=1e-5, atol=1e-6)

    print("KERNEL_OK")
</pallas_src>

<mosaic_0001>
module attributes {stable_mosaic.version = 11 : i64} {
  func.func @kernel(%arg0: i32, %arg1: i32, %arg2: memref<8x128xf32, #tpu.memory_space<vmem>>, %arg3: memref<8x128xf32, #tpu.memory_space<vmem>>, %arg4: memref<16x128xf32, #tpu.memory_space<vmem>>, %arg5: memref<16x128xf32, #tpu.memory_space<vmem>>, %arg6: memref<8x128xf32, #tpu.memory_space<vmem>>, %arg7: memref<8x128xf32, #tpu.memory_space<vmem>>, %arg8: memref<8x128xf32, #tpu.memory_space<vmem>>, %arg9: memref<16x128xf32, #tpu.memory_space<vmem>>) attributes {dimension_semantics = [#tpu.dimension_semantics<parallel>, #tpu.dimension_semantics<arbitrary>], iteration_bounds = array<i64: 2, 1>, scalar_prefetch = 0 : i64, scratch_operands = 2 : i64, tpu.core_type = #tpu.core_type<tc>, window_params = [{transform_indices = @transform_0, window_bounds = array<i64: 8, 128>}, {transform_indices = @transform_1, window_bounds = array<i64: 8, 128>}, {transform_indices = @transform_2, window_bounds = array<i64: 16, 128>}, {transform_indices = @transform_3, window_bounds = array<i64: 16, 128>}, {transform_indices = @transform_4, window_bounds = array<i64: 8, 128>}, {transform_indices = @transform_5, window_bounds = array<i64: 8, 128>}]} {
    %c1_i32 = arith.constant 1 : i32
    %0 = arith.muli %arg0, %c1_i32 : i32
    %1 = arith.addi %0, %arg1 : i32
    %c0_i32 = arith.constant 0 : i32
    %2 = arith.cmpi eq, %arg1, %c0_i32 : i32
    %3 = arith.extui %2 : i1 to i32
    %c0_i32_0 = arith.constant 0 : i32
    %4 = arith.cmpi ne, %3, %c0_i32_0 : i32
    scf.if %4 {
      %cst = arith.constant 0.000000e+00 : f32
      %17 = vector.broadcast %cst : f32 to vector<8x128xf32>
      %c0 = arith.constant 0 : index
      %c0_9 = arith.constant 0 : index
      %18 = vector.load %arg8[%c0, %c0_9] : memref<8x128xf32, #tpu.memory_space<vmem>>, vector<8x128xf32>
      tpu.vector_store %arg8[%c0, %c0_9], %17 {strides = array<i32>} : memref<8x128xf32, #tpu.memory_space<vmem>>, vector<8x128xf32>,
      %cst_10 = arith.constant 0.000000e+00 : f32
      %19 = vector.broadcast %cst_10 : f32 to vector<16x128xf32>
      %c0_11 = arith.constant 0 : index
      %c0_12 = arith.constant 0 : index
      %20 = vector.load %arg9[%c0_11, %c0_12] : memref<16x128xf32, #tpu.memory_space<vmem>>, vector<16x128xf32>
      tpu.vector_store %arg9[%c0_11, %c0_12], %19 {strides = array<i32>} : memref<16x128xf32, #tpu.memory_space<vmem>>, vector<16x128xf32>,
    } else {
    }
    %c0_i32_1 = arith.constant 0 : i32
    %5 = arith.cmpi slt, %1, %c0_i32_1 : i32
    %6 = arith.extui %5 : i1 to i32
    %c0_i32_2 = arith.constant 0 : i32
    %7 = arith.cmpi ne, %6, %c0_i32_2 : i32
    scf.if %7 {
      %c0 = arith.constant 0 : index
      %c0_9 = arith.constant 0 : index
      %17 = vector.load %arg2[%c0, %c0_9] : memref<8x128xf32, #tpu.memory_space<vmem>>, vector<8x128xf32>
      %c0_10 = arith.constant 0 : index
      %c0_11 = arith.constant 0 : index
      %18 = vector.load %arg3[%c0_10, %c0_11] : memref<8x128xf32, #tpu.memory_space<vmem>>, vector<8x128xf32>
      %19 = arith.subf %17, %18 : vector<8x128xf32>
      %c0_12 = arith.constant 0 : index
      %c0_13 = arith.constant 0 : index
      %20 = vector.load %arg8[%c0_12, %c0_13] : memref<8x128xf32, #tpu.memory_space<vmem>>, vector<8x128xf32>
      %21 = math.absf %19 : vector<8x128xf32>
      %22 = arith.addf %20, %21 : vector<8x128xf32>
      %c0_14 = arith.constant 0 : index
      %c0_15 = arith.constant 0 : index
      %23 = vector.load %arg8[%c0_14, %c0_15] : memref<8x128xf32, #tpu.memory_space<vmem>>, vector<8x128xf32>
      tpu.vector_store %arg8[%c0_14, %c0_15], %22 {strides = array<i32>} : memref<8x128xf32, #tpu.memory_space<vmem>>, vector<8x128xf32>,
    } else {
    }
    %c0_i32_3 = arith.constant 0 : i32
    %8 = arith.cmpi eq, %1, %c0_i32_3 : i32
    %9 = arith.extui %8 : i1 to i32
    %c0_i32_4 = arith.constant 0 : i32
    %10 = arith.cmpi ne, %9, %c0_i32_4 : i32
    scf.if %10 {
      %c0 = arith.constant 0 : index
      %c0_9 = arith.constant 0 : index
      %17 = vector.load %arg2[%c0, %c0_9] : memref<8x128xf32, #tpu.memory_space<vmem>>, vector<8x128xf32>
      %c0_10 = arith.constant 0 : index
      %c0_11 = arith.constant 0 : index
      %18 = vector.load %arg3[%c0_10, %c0_11] : memref<8x128xf32, #tpu.memory_space<vmem>>, vector<8x128xf32>
      %19 = arith.subf %17, %18 : vector<8x128xf32>
      %20 = tpu.iota {dimensions = array<i32: 0>} : vector<8x128xi32>
      %c8_i32 = arith.constant 8 : i32
      %21 = arith.muli %1, %c8_i32 : i32
      %c0_i32_12 = arith.constant 0 : i32
      %22 = arith.addi %21, %c0_i32_12 : i32
      %23 = vector.broadcast %22 : i32 to vector<8x128xi32>
      %24 = arith.addi %23, %20 : vector<8x128xi32>
      %c2_i32 = arith.constant 2 : i32
      %25 = vector.broadcast %c2_i32 : i32 to vector<8x128xi32>
      %26 = arith.cmpi slt, %24, %25 : vector<8x128xi32>
      %cst = arith.constant 0.000000e+00 : f32
      %27 = vector.broadcast %cst : f32 to vector<8x128xf32>
      %28 = arith.select %26, %19, %27 : vector<8x128xi1>, vector<8x128xf32>
      %c0_13 = arith.constant 0 : index
      %c0_14 = arith.constant 0 : index
      %29 = vector.load %arg8[%c0_13, %c0_14] : memref<8x128xf32, #tpu.memory_space<vmem>>, vector<8x128xf32>
      %30 = math.absf %28 : vector<8x128xf32>
      %31 = arith.addf %29, %30 : vector<8x128xf32>
      %c0_15 = arith.constant 0 : index
      %c0_16 = arith.constant 0 : index
      %32 = vector.load %arg8[%c0_15, %c0_16] : memref<8x128xf32, #tpu.memory_space<vmem>>, vector<8x128xf32>
      tpu.vector_store %arg8[%c0_15, %c0_16], %31 {strides = array<i32>} : memref<8x128xf32, #tpu.memory_space<vmem>>, vector<8x128xf32>,
    } else {
    }
    %c1_i32_5 = arith.constant 1 : i32
    %11 = arith.cmpi slt, %1, %c1_i32_5 : i32
    %12 = arith.extui %11 : i1 to i32
    %c0_i32_6 = arith.constant 0 : i32
    %13 = arith.cmpi ne, %12, %c0_i32_6 : i32
    scf.if %13 {
      %c0 = arith.constant 0 : index
      %c0_9 = arith.constant 0 : index
      %17 = vector.load %arg4[%c0, %c0_9] : memref<16x128xf32, #tpu.memory_space<vmem>>, vector<16x128xf32>
      %c0_10 = arith.constant 0 : index
      %c0_11 = arith.constant 0 : index
      %18 = vector.load %arg5[%c0_10, %c0_11] : memref<16x128xf32, #tpu.memory_space<vmem>>, vector<16x128xf32>
      %19 = arith.subf %17, %18 : vector<16x128xf32>
      %c0_12 = arith.constant 0 : index
      %c0_13 = arith.constant 0 : index
      %20 = vector.load %arg9[%c0_12, %c0_13] : memref<16x128xf32, #tpu.memory_space<vmem>>, vector<16x128xf32>
      %21 = arith.mulf %19, %19 : vector<16x128xf32>
      %22 = arith.addf %20, %21 : vector<16x128xf32>
      %c0_14 = arith.constant 0 : index
      %c0_15 = arith.constant 0 : index
      %23 = vector.load %arg9[%c0_14, %c0_15] : memref<16x128xf32, #tpu.memory_space<vmem>>, vector<16x128xf32>
      tpu.vector_store %arg9[%c0_14, %c0_15], %22 {strides = array<i32>} : memref<16x128xf32, #tpu.memory_space<vmem>>, vector<16x128xf32>,
    } else {
    }
    %c0_i32_7 = arith.constant 0 : i32
    %14 = arith.cmpi eq, %arg1, %c0_i32_7 : i32
    %15 = arith.extui %14 : i1 to i32
    %c0_i32_8 = arith.constant 0 : i32
    %16 = arith.cmpi ne, %15, %c0_i32_8 : i32
    scf.if %16 {
      %17 = tpu.iota {dimensions = array<i32: 0>} : vector<8x128xi32>
      %c0_i32_9 = arith.constant 0 : i32
      %18 = vector.broadcast %c0_i32_9 : i32 to vector<8x128xi32>
      %19 = arith.cmpi eq, %17, %18 : vector<8x128xi32>
      %c0 = arith.constant 0 : index
      %c0_10 = arith.constant 0 : index
      %20 = vector.load %arg8[%c0, %c0_10] : memref<8x128xf32, #tpu.memory_space<vmem>>, vector<8x128xf32>
      %cst = arith.constant dense<0.000000e+00> : vector<128xf32>
      %21 = vector.multi_reduction <add>, %20, %cst [0] : vector<8x128xf32> to vector<128xf32>
      %22 = vector.shape_cast %21 : vector<128xf32> to vector<1x128xf32>
      %cst_11 = arith.constant 0.000000e+00 : f32
      %23 = vector.shape_cast %22 : vector<1x128xf32> to vector<1x128xf32>
      %24 = vector.broadcast %23 : vector<1x128xf32> to vector<8x128xf32>
      %25 = vector.broadcast %cst_11 : f32 to vector<8x128xf32>
      %26 = arith.select %19, %24, %25 : vector<8x128xi1>, vector<8x128xf32>
      %c0_12 = arith.constant 0 : index
      %c0_13 = arith.constant 0 : index
      %27 = vector.load %arg6[%c0_12, %c0_13] : memref<8x128xf32, #tpu.memory_space<vmem>>, vector<8x128xf32>
      tpu.vector_store %arg6[%c0_12, %c0_13], %26 {strides = array<i32>} : memref<8x128xf32, #tpu.memory_space<vmem>>, vector<8x128xf32>,
      %c0_i32_14 = arith.constant 0 : i32
      %28 = vector.broadcast %c0_i32_14 : i32 to vector<8x128xi32>
      %29 = arith.cmpi eq, %17, %28 : vector<8x128xi32>
      %c0_15 = arith.constant 0 : index
      %c0_16 = arith.constant 0 : index
      %30 = vector.load %arg9[%c0_15, %c0_16] : memref<16x128xf32, #tpu.memory_space<vmem>>, vector<16x128xf32>
      %cst_17 = arith.constant dense<0.000000e+00> : vector<128xf32>
      %31 = vector.multi_reduction <add>, %30, %cst_17 [0] : vector<16x128xf32> to vector<128xf32>
      %32 = vector.shape_cast %31 : vector<128xf32> to vector<1x128xf32>
      %cst_18 = arith.constant 0.000000e+00 : f32
      %33 = vector.shape_cast %32 : vector<1x128xf32> to vector<1x128xf32>
      %34 = vector.broadcast %33 : vector<1x128xf32> to vector<8x128xf32>
      %35 = vector.broadcast %cst_18 : f32 to vector<8x128xf32>
      %36 = arith.select %29, %34, %35 : vector<8x128xi1>, vector<8x128xf32>
      %c0_19 = arith.constant 0 : index
      %c0_20 = arith.constant 0 : index
      %37 = vector.load %arg7[%c0_19, %c0_20] : memref<8x128xf32, #tpu.memory_space<vmem>>, vector<8x128xf32>
      tpu.vector_store %arg7[%c0_19, %c0_20], %36 {strides = array<i32>} : memref<8x128xf32, #tpu.memory_space<vmem>>, vector<8x128xf32>,
    } else {
    }
    return
  }
  func.func @transform_0(%arg0: i32, %arg1: i32) -> (i32, i32) {
    %c1_i32 = arith.constant 1 : i32
    %0 = arith.muli %arg0, %c1_i32 : i32
    %1 = arith.addi %0, %arg1 : i32
    %c0_i32 = arith.constant 0 : i32
    %2 = arith.minsi %1, %c0_i32 : i32
    %c0_i32_0 = arith.constant 0 : i32
    %c0_i32_1 = arith.constant 0 : i32
    return %2, %c0_i32_0 : i32, i32
  }
  func.func @transform_1(%arg0: i32, %arg1: i32) -> (i32, i32) {
    %c1_i32 = arith.constant 1 : i32
    %0 = arith.muli %arg0, %c1_i32 : i32
    %1 = arith.addi %0, %arg1 : i32
    %c0_i32 = arith.constant 0 : i32
    %2 = arith.minsi %1, %c0_i32 : i32
    %c0_i32_0 = arith.constant 0 : i32
    %c0_i32_1 = arith.constant 0 : i32
    return %2, %c0_i32_0 : i32, i32
  }
  func.func @transform_2(%arg0: i32, %arg1: i32) -> (i32, i32) {
    %c1_i32 = arith.constant 1 : i32
    %0 = arith.muli %arg0, %c1_i32 : i32
    %1 = arith.addi %0, %arg1 : i32
    %c0_i32 = arith.constant 0 : i32
    %2 = arith.minsi %1, %c0_i32 : i32
    %c0_i32_0 = arith.constant 0 : i32
    %c0_i32_1 = arith.constant 0 : i32
    return %2, %c0_i32_0 : i32, i32
  }
  func.func @transform_3(%arg0: i32, %arg1: i32) -> (i32, i32) {
    %c1_i32 = arith.constant 1 : i32
    %0 = arith.muli %arg0, %c1_i32 : i32
    %1 = arith.addi %0, %arg1 : i32
    %c0_i32 = arith.constant 0 : i32
    %2 = arith.minsi %1, %c0_i32 : i32
    %c0_i32_0 = arith.constant 0 : i32
    %c0_i32_1 = arith.constant 0 : i32
    return %2, %c0_i32_0 : i32, i32
  }
  func.func @transform_4(%arg0: i32, %arg1: i32) -> (i32, i32) {
    %c0_i32 = arith.constant 0 : i32
    %c0_i32_0 = arith.constant 0 : i32
    return %arg0, %c0_i32 : i32, i32
  }
  func.func @transform_5(%arg0: i32, %arg1: i32) -> (i32, i32) {
    %c0_i32 = arith.constant 0 : i32
    %c0_i32_0 = arith.constant 0 : i32
    return %arg0, %c0_i32 : i32, i32
  }
}

</mosaic_0001>

<llo_original>
// kernel: tpu_custom_call.1
$region0: #{tpu_custom_call.1}
  #allocation0 [shape = 'u32[]', space=smem, size = 0x4, offset = 0x4, fixed_abs, tag = 'smem constant byte address 0x4 - core index']
  #allocation1 [shape = 'u32[144,128]{1,0:T(1,128)}', space=vmem, size = 0x12000, scoped, tag = 'internal scratch']
  #allocation2 [shape = 'f32[8,128]{1,0:T(8,128)}', space=vmem, size = 0x1000, scoped, tag = 'scratch operand']
  #allocation3 [shape = 'f32[16,128]{1,0:T(8,128)}', space=vmem, size = 0x2000, scoped, tag = 'scratch operand']
  %s0 = inlined_call_operand.hbm [shape: f32[2,128], index: 0, kind: input, shape index: {}]
  %s1 = inlined_call_operand.vmem [shape: f32[2,128], index: 1, kind: input, shape index: {}]
  %s2 = inlined_call_operand.hbm [shape: f32[16,128], index: 2, kind: input, shape index: {}]
  %s3 = inlined_call_operand.hbm [shape: f32[16,128], index: 3, kind: input, shape index: {}]
  %s4 = inlined_call_operand.hbm [shape: f32[16,128], index: 4, kind: output, shape index: {0}]
  %s5 = inlined_call_operand.hbm [shape: f32[16,128], index: 5, kind: output, shape index: {1}]
  %6 = xla_tuple %s4, %s5
  %s7 = sld [smem:[#allocation0]]
  $region89: #{tpu_custom_call.1} parent=0
    _
  %s9 = ssub.s32 1, %s7
  %s10 = scalar_select 0, %s9, %s7
  $region1: #{tpu_custom_call.1} parent=0
    #allocation4 [shape = 'u8[8192]{0}', space=vmem, size = 0x2000, scoped, tag = 'input window, operand 0']
    #allocation5 [shape = 's32[2]{0}', space=sflag, size = 0x8, scoped, tag = 'scoped memory for tpu_custom_call.1']
    #allocation6 [shape = 's32[2]{0}', space=sflag, size = 0x8, scoped, tag = 'scoped memory for tpu_custom_call.1']
    #allocation7 [shape = 'u8[16384]{0}', space=vmem, size = 0x4000, scoped, tag = 'input window, operand 2']
    #allocation8 [shape = 's32[2]{0}', space=sflag, size = 0x8, scoped, tag = 'scoped memory for tpu_custom_call.1']
    #allocation9 [shape = 'u8[16384]{0}', space=vmem, size = 0x4000, scoped, tag = 'input window, operand 3']
    #allocation10 [shape = 'u8[8192]{0}', space=vmem, size = 0x2000, scoped, tag = 'output window, operand 0']
    #allocation11 [shape = 'u8[8192]{0}', space=vmem, size = 0x2000, scoped, tag = 'output window, operand 1']
    #allocation12 [shape = 's32[2]{0}', space=sflag, size = 0x8, scoped, tag = 'scoped memory for tpu_custom_call.1']
    %11 = vsyncpa [#allocation5], 0
    %s12 = scalar_lea.sflag [#allocation5], 1
    %13 = vsyncpa %s12, 0
    %14 = vsyncpa [#allocation8], 0
    %s15 = scalar_lea.sflag [#allocation8], 1
    %16 = vsyncpa %s15, 0
    %17 = vsyncpa [#allocation6], 0
    %s18 = scalar_lea.sflag [#allocation6], 1
    %19 = vsyncpa %s18, 0
    %20 = vsyncpa [#allocation12], 0
    %s21 = scalar_lea.sflag [#allocation12], 1
    %22 = vsyncpa %s21, 0
    loop: start=0, step=1, limit=4
    $region2: #{tpu_custom_call.1} parent=1 // loop_pre_header
      _
    $region3: #{tpu_custom_call.1} parent=1 // loop_header
      %s24 = sphi 0, %s28
      %p25 = scmp.ge.s32.totalorder %s24, 4
      %s31 = sphi 0, %s43
      %s32 = sphi 0, %s39
      %s33 = sphi 0, %s31
      %s34 = sphi 0, %s32
      %s35 = sphi 0, %s33
      %s36 = sphi 0, %s34
      %s52 = sphi 0, %s54
      %s55 = sphi 0, %s52
      %s56 = sphi 0, %s55
      %s72 = sphi 0, %s56
      %s84 = sphi 0, %s86
      %s87 = sphi 0, %s84
      %s88 = sphi 0, %s87
      %s104 = sphi 0, %s88
      %s116 = sphi 0, %s118
      %s119 = sphi 0, %s116
      %s120 = sphi 0, %s119
      %s136 = sphi 0, %s120
      %s148 = sphi 0, %s150
      %s151 = sphi 0, %s148
      %s152 = sphi 0, %s151
      %s168 = sphi 0, %s152
      %s174 = sphi 0, %s176
      %s177 = sphi 0, %s174
      %s178 = sphi 0, %s177
      %s194 = sphi 0, %s178
      %s200 = sphi 0, %s202
      %s203 = sphi 0, %s200
      %s204 = sphi 0, %s203
      %s220 = sphi 0, %s204
    $region4: #{tpu_custom_call.1} parent=1 // loop_header_branch
      %27 = sbr.rel (%p25) target = $region8
    $region5: #{tpu_custom_call.1} parent=1 // loop_body
      %s29 = ssub.s32 %s24, 1
      %s30 = ssub.s32 %s24, 2
      %s37 = sadd.s32 1, %s32
      %p38 = scmp.ge.s32.totalorder %s37, 1
      %s39 = scalar_select %p38, 0, %s37
      %s40 = sadd.s32 1, %s31
      %s41 = scalar_select %p38, %s40, %s31
      %p42 = scmp.ge.s32.totalorder %s41, 2
      %s43 = scalar_select %p42, 0, %s41
      %s44 = sadd.s32 %s31, %s32
      %p45 = scmp.lt.s32.totalorder %s44, 0
      %s46 = scalar_select %p45, %s44, 0
      %s47 = sadd.s32 %s43, %s39
      %p48 = scmp.lt.s32.totalorder %s47, 0
      %s49 = scalar_select %p48, %s47, 0
      %s50 = ssub.s32 %s46, %s49
      %p51 = scmp.eq.s32.totalorder %s50, 0
      %s53 = sadd.s32 %s52, 1
      %s54 = scalar_select %p51, %s52, %s53
      %p57 = pneg %p51
      %p58 = scmp.eq.s32.totalorder %s24, 1
      %p59 = por %p57, %p58
      %p60 = scmp.ne.s32.totalorder %s52, %s55
      %p61 = scmp.eq.s32.totalorder %s24, 0
      %p62 = por %p60, %p61
      %p63 = scmp.ne.s32.totalorder %s52, %s55
      %p64 = scmp.eq.s32.totalorder %s29, 1
      %p65 = por %p63, %p64
      %p66 = scmp.ne.s32.totalorder %s55, %s56
      %p67 = scmp.eq.s32.totalorder %s29, 0
      %p68 = por %p66, %p67
      %p69 = scmp.ne.s32.totalorder %s55, %s56
      %p70 = scmp.eq.s32.totalorder %s30, 1
      %p71 = por %p69, %p70
      %p73 = scmp.ne.s32.totalorder %s56, %s72
      %p74 = scmp.eq.s32.totalorder %s30, 0
      %p75 = por %p73, %p74
      %s76 = sadd.s32 %s31, %s32
      %p77 = scmp.lt.s32.totalorder %s76, 0
      %s78 = scalar_select %p77, %s76, 0
      %s79 = sadd.s32 %s43, %s39
      %p80 = scmp.lt.s32.totalorder %s79, 0
      %s81 = scalar_select %p80, %s79, 0
      %s82 = ssub.s32 %s78, %s81
      %p83 = scmp.eq.s32.totalorder %s82, 0
      %s85 = sadd.s32 %s84, 1
      %s86 = scalar_select %p83, %s84, %s85
      %p89 = pneg %p83
      %p90 = scmp.eq.s32.totalorder %s24, 1
      %p91 = por %p89, %p90
      %p92 = scmp.ne.s32.totalorder %s84, %s87
      %p93 = scmp.eq.s32.totalorder %s24, 0
      %p94 = por %p92, %p93
      %p95 = scmp.ne.s32.totalorder %s84, %s87
      %p96 = scmp.eq.s32.totalorder %s29, 1
      %p97 = por %p95, %p96
      %p98 = scmp.ne.s32.totalorder %s87, %s88
      %p99 = scmp.eq.s32.totalorder %s29, 0
      %p100 = por %p98, %p99
      %p101 = scmp.ne.s32.totalorder %s87, %s88
      %p102 = scmp.eq.s32.totalorder %s30, 1
      %p103 = por %p101, %p102
      %p105 = scmp.ne.s32.totalorder %s88, %s104
      %p106 = scmp.eq.s32.totalorder %s30, 0
      %p107 = por %p105, %p106
      %s108 = sadd.s32 %s31, %s32
      %p109 = scmp.lt.s32.totalorder %s108, 0
      %s110 = scalar_select %p109, %s108, 0
      %s111 = sadd.s32 %s43, %s39
      %p112 = scmp.lt.s32.totalorder %s111, 0
      %s113 = scalar_select %p112, %s111, 0
      %s114 = ssub.s32 %s110, %s113
      %p115 = scmp.eq.s32.totalorder %s114, 0
      %s117 = sadd.s32 %s116, 1
      %s118 = scalar_select %p115, %s116, %s117
      %p121 = pneg %p115
      %p122 = scmp.eq.s32.totalorder %s24, 1
      %p123 = por %p121, %p122
      %p124 = scmp.ne.s32.totalorder %s116, %s119
      %p125 = scmp.eq.s32.totalorder %s24, 0
      %p126 = por %p124, %p125
      %p127 = scmp.ne.s32.totalorder %s116, %s119
      %p128 = scmp.eq.s32.totalorder %s29, 1
      %p129 = por %p127, %p128
      %p130 = scmp.ne.s32.totalorder %s119, %s120
      %p131 = scmp.eq.s32.totalorder %s29, 0
      %p132 = por %p130, %p131
      %p133 = scmp.ne.s32.totalorder %s119, %s120
      %p134 = scmp.eq.s32.totalorder %s30, 1
      %p135 = por %p133, %p134
      %p137 = scmp.ne.s32.totalorder %s120, %s136
      %p138 = scmp.eq.s32.totalorder %s30, 0
      %p139 = por %p137, %p138
      %s140 = sadd.s32 %s31, %s32
      %p141 = scmp.lt.s32.totalorder %s140, 0
      %s142 = scalar_select %p141, %s140, 0
      %s143 = sadd.s32 %s43, %s39
      %p144 = scmp.lt.s32.totalorder %s143, 0
      %s145 = scalar_select %p144, %s143, 0
      %s146 = ssub.s32 %s142, %s145
      %p147 = scmp.eq.s32.totalorder %s146, 0
      %s149 = sadd.s32 %s148, 1
      %s150 = scalar_select %p147, %s148, %s149
      %p153 = pneg %p147
      %p154 = scmp.eq.s32.totalorder %s24, 1
      %p155 = por %p153, %p154
      %p156 = scmp.ne.s32.totalorder %s148, %s151
      %p157 = scmp.eq.s32.totalorder %s24, 0
      %p158 = por %p156, %p157
      %p159 = scmp.ne.s32.totalorder %s148, %s151
      %p160 = scmp.eq.s32.totalorder %s29, 1
      %p161 = por %p159, %p160
      %p162 = scmp.ne.s32.totalorder %s151, %s152
      %p163 = scmp.eq.s32.totalorder %s29, 0
      %p164 = por %p162, %p163
      %p165 = scmp.ne.s32.totalorder %s151, %s152
      %p166 = scmp.eq.s32.totalorder %s30, 1
      %p167 = por %p165, %p166
      %p169 = scmp.ne.s32.totalorder %s152, %s168
      %p170 = scmp.eq.s32.totalorder %s30, 0
      %p171 = por %p169, %p170
      %s172 = ssub.s32 %s31, %s43
      %p173 = scmp.eq.s32.totalorder %s172, 0
      %s175 = sadd.s32 %s174, 1
      %s176 = scalar_select %p173, %s174, %s175
      %p179 = pneg %p173
      %p180 = scmp.eq.s32.totalorder %s24, 1
      %p181 = por %p179, %p180
      %p182 = scmp.ne.s32.totalorder %s174, %s177
      %p183 = scmp.eq.s32.totalorder %s24, 0
      %p184 = por %p182, %p183
      %p185 = scmp.ne.s32.totalorder %s174, %s177
      %p186 = scmp.eq.s32.totalorder %s29, 1
      %p187 = por %p185, %p186
      %p188 = scmp.ne.s32.totalorder %s177, %s178
      %p189 = scmp.eq.s32.totalorder %s29, 0
      %p190 = por %p188, %p189
      %p191 = scmp.ne.s32.totalorder %s177, %s178
      %p192 = scmp.eq.s32.totalorder %s30, 1
      %p193 = por %p191, %p192
      %p195 = scmp.ne.s32.totalorder %s178, %s194
      %p196 = scmp.eq.s32.totalorder %s30, 0
      %p197 = por %p195, %p196
      %s198 = ssub.s32 %s31, %s43
      %p199 = scmp.eq.s32.totalorder %s198, 0
      %s201 = sadd.s32 %s200, 1
      %s202 = scalar_select %p199, %s200, %s201
      %p205 = pneg %p199
      %p206 = scmp.eq.s32.totalorder %s24, 1
      %p207 = por %p205, %p206
      %p208 = scmp.ne.s32.totalorder %s200, %s203
      %p209 = scmp.eq.s32.totalorder %s24, 0
      %p210 = por %p208, %p209
      %p211 = scmp.ne.s32.totalorder %s200, %s203
      %p212 = scmp.eq.s32.totalorder %s29, 1
      %p213 = por %p211, %p212
      %p214 = scmp.ne.s32.totalorder %s203, %s204
      %p215 = scmp.eq.s32.totalorder %s29, 0
      %p216 = por %p214, %p215
      %p217 = scmp.ne.s32.totalorder %s203, %s204
      %p218 = scmp.eq.s32.totalorder %s30, 1
      %p219 = por %p217, %p218
      %p221 = scmp.ne.s32.totalorder %s204, %s220
      %p222 = scmp.eq.s32.totalorder %s30, 0
      %p223 = por %p221, %p222
      %p224 = scmp.le.s32.totalorder 1, %s24
      %p225 = scmp.lt.s32.totalorder %s24, 3
      %p226 = pnand %p224, %p225
      %p227 = pneg %p226
      // Predicated region
      $region9: #{tpu_custom_call.1} parent=5 // pred_check
        _
      $region10: #{tpu_custom_call.1} parent=5 // pred_check_branch
        %229 = sbr.rel (%p226) target = $region12
      $region11: #{tpu_custom_call.1} parent=5 // pred_region
        %s230 = ssub.s32 %s24, 1
      $region12: #{tpu_custom_call.1} parent=5 // pred_fallthru
        _
      %p231 = scmp.lt.s32.totalorder %s24, 2
      // Predicated region
      $region13: #{tpu_custom_call.1} parent=5 // pred_check
        %p232 = pneg %p231
      $region14: #{tpu_custom_call.1} parent=5 // pred_check_branch
        %234 = sbr.rel (%p232) target = $region16
      $region15: #{tpu_custom_call.1} parent=5 // pred_region
        // Predicated region
        $region17: #{tpu_custom_call.1} parent=15 // pred_check
          %p235 = pneg %p62
        $region18: #{tpu_custom_call.1} parent=15 // pred_check_branch
          %237 = sbr.rel (%p235) target = $region20
        $region19: #{tpu_custom_call.1} parent=15 // pred_region
          %s238 = sand.u32 %s52, 1
          %s239 = scalar_lea.sflag [#allocation5], %s238
          %s240 = sand.u32 %s52, 1
          %s241 = smul.addr %s240, 8
          %s242 = scalar_lea.vmem [#allocation4], %s241
          %s243 = sadd.s32 %s31, %s32
          %p244 = scmp.lt.s32.totalorder %s243, 0
          %s245 = scalar_select %p244, %s243, 0
          %s246 = smul.u32 4, %s245
          %s247 = ssub.s32 1, %s246
          %s248 = smul.u32 32, %s247
          %s250 = ssub.s32 128, %s248
          %251 = vsyncadd %s239, %s250
          %p252 = scmp.ne.s32.totalorder 0, %s248
          %s253 = smul.addr %s246, 32
          %s254 = scalar_lea.hbm %s0, %s253
          %s255 = smul.u32 2, %s247
          %s256 = sshll.u32 %s242, 4
          %s257 = int_to_ptr.vmem [resolvable:$true] %s256
          %s258 = sshll.u32 %s255, 4
          %262 = dma.hbm_to_vmem [thread:$0]  (%p252), %s254, %s258, %s257, %s239, 32, 32, 2
        $region20: #{tpu_custom_call.1} parent=15 // pred_fallthru
          _
        // Predicated region
        $region21: #{tpu_custom_call.1} parent=15 // pred_check
          %p263 = pneg %p94
        $region22: #{tpu_custom_call.1} parent=15 // pred_check_branch
          %265 = sbr.rel (%p263) target = $region24
        $region23: #{tpu_custom_call.1} parent=15 // pred_region
          %s266 = sadd.s32 %s31, %s32
          %p267 = scmp.lt.s32.totalorder %s266, 0
          %s268 = scalar_select %p267, %s266, 0
          %s269 = smul.u32 4, %s268
          %s270 = ssub.s32 1, %s269
          %s271 = smul.u32 32, %s270
          %p272 = scmp.lt.s32.totalorder %s269, 0
          %s273 = scalar_select %p272, %s269, 0
          %s274 = smul.addr %s273, 2
          %s275 = scalar_lea.vmem %s1, %s274
          %s276 = sadd.s32 %s31, %s32
          %p277 = scmp.lt.s32.totalorder %s276, 0
          %s278 = scalar_select %p277, %s276, 0
          %s279 = smul.u32 4, %s278
          %s280 = ssub.s32 1, %s279
          %s281 = smul.u32 32, %s280
        $region24: #{tpu_custom_call.1} parent=15 // pred_fallthru
          _
        // Predicated region
        $region25: #{tpu_custom_call.1} parent=15 // pred_check
          %p282 = pneg %p126
        $region26: #{tpu_custom_call.1} parent=15 // pred_check_branch
          %284 = sbr.rel (%p282) target = $region28
        $region27: #{tpu_custom_call.1} parent=15 // pred_region
          %s285 = sand.u32 %s24, 1
          %s286 = scalar_lea.sflag [#allocation8], %s285
          %s287 = sand.u32 %s116, 1
          %s288 = smul.addr %s287, 16
          %s289 = scalar_lea.vmem [#allocation7], %s288
          %s290 = sadd.s32 %s31, %s32
          %p291 = scmp.lt.s32.totalorder %s290, 0
          %s292 = scalar_select %p291, %s290, 0
          %s293 = smul.u32 2, %s292
          %s295 = ssub.s32 256, 256
          %296 = vsyncadd %s286, %s295
          %s297 = smul.addr %s293, 128
          %s298 = scalar_lea.hbm %s2, %s297
          %s299 = sshll.u32 %s289, 4
          %s300 = int_to_ptr.vmem [resolvable:$true] %s299
          %305 = dma.hbm_to_vmem [thread:$0]  %s298, 256, %s300, %s286, 128, 128, 8
        $region28: #{tpu_custom_call.1} parent=15 // pred_fallthru
          _
        // Predicated region
        $region29: #{tpu_custom_call.1} parent=15 // pred_check
          %p306 = pneg %p158
        $region30: #{tpu_custom_call.1} parent=15 // pred_check_branch
          %308 = sbr.rel (%p306) target = $region32
        $region31: #{tpu_custom_call.1} parent=15 // pred_region
          %s309 = sand.u32 %s24, 1
          %s310 = scalar_lea.sflag [#allocation8], %s309
          %s311 = sand.u32 %s148, 1
          %s312 = smul.addr %s311, 16
          %s313 = scalar_lea.vmem [#allocation9], %s312
          %s314 = sadd.s32 %s31, %s32
          %p315 = scmp.lt.s32.totalorder %s314, 0
          %s316 = scalar_select %p315, %s314, 0
          %s317 = smul.u32 2, %s316
          %s319 = ssub.s32 256, 256
          %320 = vsyncadd %s310, %s319
          %s321 = smul.addr %s317, 128
          %s322 = scalar_lea.hbm %s3, %s321
          %s323 = sshll.u32 %s313, 4
          %s324 = int_to_ptr.vmem [resolvable:$true] %s323
          %329 = dma.hbm_to_vmem [thread:$0]  %s322, 256, %s324, %s310, 128, 128, 8
        $region32: #{tpu_custom_call.1} parent=15 // pred_fallthru
          _
      $region16: #{tpu_custom_call.1} parent=5 // pred_fallthru
        _
      %p330 = scmp.le.s32.totalorder 1, %s24
      %p331 = scmp.lt.s32.totalorder %s24, 3
      %p332 = pnand %p330, %p331
      %p333 = pneg %p332
      // Predicated region
      $region33: #{tpu_custom_call.1} parent=5 // pred_check
        _
      $region34: #{tpu_custom_call.1} parent=5 // pred_check_branch
        %335 = sbr.rel (%p332) target = $region36
      $region35: #{tpu_custom_call.1} parent=5 // pred_region
        %s336 = ssub.s32 %s24, 1
        %s337 = sand.u32 %s55, 1
        %s338 = scalar_lea.sflag [#allocation5], %s337
        %s339 = sand.u32 %s55, 1
        %s340 = smul.addr %s339, 8
        %s341 = scalar_lea.vmem [#allocation4], %s340
        // Predicated region
        $region37: #{tpu_custom_call.1} parent=35 // pred_check
          %p342 = pneg %p68
        $region38: #{tpu_custom_call.1} parent=35 // pred_check_branch
          %344 = sbr.rel (%p342) target = $region40
        $region39: #{tpu_custom_call.1} parent=35 // pred_region
          %345 = dma.done %s338, 128
        $region40: #{tpu_custom_call.1} parent=35 // pred_fallthru
          _
        %s346 = sand.u32 %s29, 1
        %s347 = scalar_lea.sflag [#allocation8], %s346
        %s348 = sand.u32 %s119, 1
        %s349 = smul.addr %s348, 16
        %s350 = scalar_lea.vmem [#allocation7], %s349
        // Predicated region
        $region41: #{tpu_custom_call.1} parent=35 // pred_check
          %p351 = pneg %p132
        $region42: #{tpu_custom_call.1} parent=35 // pred_check_branch
          %353 = sbr.rel (%p351) target = $region44
        $region43: #{tpu_custom_call.1} parent=35 // pred_region
          %354 = dma.done %s347, 256
        $region44: #{tpu_custom_call.1} parent=35 // pred_fallthru
          _
        %s355 = sand.u32 %s29, 1
        %s356 = scalar_lea.sflag [#allocation8], %s355
        %s357 = sand.u32 %s151, 1
        %s358 = smul.addr %s357, 16
        %s359 = scalar_lea.vmem [#allocation9], %s358
        // Predicated region
        $region45: #{tpu_custom_call.1} parent=35 // pred_check
          %p360 = pneg %p164
        $region46: #{tpu_custom_call.1} parent=35 // pred_check_branch
          %362 = sbr.rel (%p360) target = $region48
        $region47: #{tpu_custom_call.1} parent=35 // pred_region
          %363 = dma.done %s356, 256
        $region48: #{tpu_custom_call.1} parent=35 // pred_fallthru
          _
        %s364 = sand.u32 %s55, 1
        %s365 = scalar_lea.sflag [#allocation5], %s364
        %s366 = sand.u32 %s55, 1
        %s367 = smul.addr %s366, 8
        %s368 = scalar_lea.vmem [#allocation4], %s367
        %p369 = pneg %p68
        %p370 = pneg %p65
        %s371 = sadd.s32 %s33, %s34
        %p372 = scmp.lt.s32.totalorder %s371, 0
        %s373 = scalar_select %p372, %s371, 0
        %s374 = smul.u32 4, %s373
        %s375 = ssub.s32 1, %s374
        %s376 = smul.u32 32, %s375
        %p377 = scmp.lt.s32.totalorder %s374, 0
        %s378 = scalar_select %p377, %s374, 0
        %s379 = smul.addr %s378, 2
        %s380 = scalar_lea.vmem %s1, %s379
        %p381 = pneg %p100
        %p382 = pneg %p97
        %s383 = sand.u32 %s29, 1
        %s384 = scalar_lea.sflag [#allocation8], %s383
        %s385 = sand.u32 %s119, 1
        %s386 = smul.addr %s385, 16
        %s387 = scalar_lea.vmem [#allocation7], %s386
        %p388 = pneg %p132
        %p389 = pneg %p129
        %s390 = sand.u32 %s29, 1
        %s391 = scalar_lea.sflag [#allocation8], %s390
        %s392 = sand.u32 %s151, 1
        %s393 = smul.addr %s392, 16
        %s394 = scalar_lea.vmem [#allocation9], %s393
        %p395 = pneg %p164
        %p396 = pneg %p161
        %p397 = pneg %p190
        %p398 = pneg %p187
        %s399 = sand.u32 %s177, 1
        %s400 = scalar_lea.sflag [#allocation6], %s399
        %s401 = sand.u32 %s177, 1
        %s402 = smul.addr %s401, 8
        %s403 = scalar_lea.vmem [#allocation10], %s402
        %p404 = pneg %p216
        %p405 = pneg %p213
        %s406 = sand.u32 %s203, 1
        %s407 = scalar_lea.sflag [#allocation12], %s406
        %s408 = sand.u32 %s203, 1
        %s409 = smul.addr %s408, 8
        %s410 = scalar_lea.vmem [#allocation11], %s409
        %s411 = sadd.s32 %s33, %s34
        %p412 = scmp.lt.s32.totalorder %s411, 0
        %s413 = scalar_select %p412, %s411, 0
        %s414 = smul.u32 4, %s413
        %s415 = ssub.s32 1, %s414
        %s416 = smul.u32 32, %s415
        %s417 = sadd.s32 %s33, %s34
        %p418 = scmp.lt.s32.totalorder %s417, 0
        %s419 = scalar_select %p418, %s417, 0
        %s420 = smul.u32 4, %s419
        %s421 = ssub.s32 1, %s420
        %s422 = smul.u32 32, %s421
        %p423 = scmp.lt.s32.totalorder %s420, 0
        %s424 = scalar_select %p423, %s420, 0
        %s425 = smul.addr %s424, 2
        %s426 = scalar_lea.vmem %s1, %s425
        %s427 = sadd.s32 %s33, %s34
        %p428 = scmp.lt.s32.totalorder %s427, 0
        %s429 = scalar_select %p428, %s427, 0
        %s430 = smul.u32 4, %s429
        %s431 = ssub.s32 1, %s430
        %s432 = smul.u32 32, %s431
        %s433 = sadd.s32 %s33, %s34
        %p434 = scmp.lt.s32.totalorder %s433, 0
        %s435 = scalar_select %p434, %s433, 0
        %s436 = smul.u32 2, %s435
        %s437 = sadd.s32 %s33, %s34
        %p438 = scmp.lt.s32.totalorder %s437, 0
        %s439 = scalar_select %p438, %s437, 0
        %s440 = smul.u32 2, %s439
        %s441 = sadd.s32 %s33, %s34
        %p442 = scmp.eq.s32.totalorder %s34, 0
        // Predicated region
        $region49: #{tpu_custom_call.1} parent=35 // pred_check
          %p443 = pneg %p442
        $region50: #{tpu_custom_call.1} parent=35 // pred_check_branch
          %445 = sbr.rel (%p443) target = $region52
        $region51: #{tpu_custom_call.1} parent=35 // pred_region
          %446 = vst [vmem:[#allocation2] sm:$0xff] 0.0
          %447 = vst [vmem:[#allocation3] sm:$0xff] 0.0
          %448 = vst [vmem:[#allocation3 + $0x8] sm:$0xff] 0.0
        $region52: #{tpu_custom_call.1} parent=35 // pred_fallthru
          _
        %p449 = scmp.lt.s32.totalorder %s441, 0
        // Predicated region
        $region53: #{tpu_custom_call.1} parent=35 // pred_check
          %p450 = pneg %p449
        $region54: #{tpu_custom_call.1} parent=35 // pred_check_branch
          %452 = sbr.rel (%p450) target = $region56
        $region55: #{tpu_custom_call.1} parent=35 // pred_region
          %v453 = vld [vmem:[%s341] sm:$0xff]
          %v454 = vld [vmem:[%s426] sm:$0xff]
          %v455 = vsub.f32 %v453, %v454
          %v456 = vld [vmem:[#allocation2] sm:$0xff]
          %v457 = vand.u32 2147483647, %v455
          %v458 = vadd.f32 %v456, %v457
          %459 = vst [vmem:[#allocation2] sm:$0xff] %v458
        $region56: #{tpu_custom_call.1} parent=35 // pred_fallthru
          _
        %p460 = scmp.eq.s32.totalorder %s441, 0
        // Predicated region
        $region57: #{tpu_custom_call.1} parent=35 // pred_check
          %p461 = pneg %p460
        $region58: #{tpu_custom_call.1} parent=35 // pred_check_branch
          %463 = sbr.rel (%p461) target = $region60
        $region59: #{tpu_custom_call.1} parent=35 // pred_region
          %v464 = vld [vmem:[%s341] sm:$0xff]
          %v465 = vld [vmem:[%s426] sm:$0xff]
          %v466 = vsub.f32 %v464, %v465
          %v467 = vlaneseq
          %v468 = vshrl.u32 %v467, 7
          %s469 = smul.u32 %s441, 8
          %v470 = vstv %s469
          %v471 = vadd.s32 %v470, %v468
          %vm472 = vcmp.lt.s32.totalorder %v471, 2
          %v473 = vsel %vm472, %v466, 0.0
          %v474 = vld [vmem:[#allocation2] sm:$0xff]
          %v475 = vand.u32 2147483647, %v473
          %v476 = vadd.f32 %v474, %v475
          %477 = vst [vmem:[#allocation2] sm:$0xff] %v476
        $region60: #{tpu_custom_call.1} parent=35 // pred_fallthru
          _
        %p478 = scmp.lt.s32.totalorder %s441, 1
        // Predicated region
        $region61: #{tpu_custom_call.1} parent=35 // pred_check
          %p479 = pneg %p478
        $region62: #{tpu_custom_call.1} parent=35 // pred_check_branch
          %481 = sbr.rel (%p479) target = $region64
        $region63: #{tpu_custom_call.1} parent=35 // pred_region
          %v482 = vld [vmem:[%s350] sm:$0xff]
          %v483 = vld [vmem:[%s350 + $0x8] sm:$0xff]
          %v484 = vld [vmem:[%s359] sm:$0xff]
          %v485 = vld [vmem:[%s359 + $0x8] sm:$0xff]
          %v486 = vsub.f32 %v482, %v484
          %v487 = vsub.f32 %v483, %v485
          %v488 = vld [vmem:[#allocation3] sm:$0xff]
          %v489 = vld [vmem:[#allocation3 + $0x8] sm:$0xff]
          %v490 = vmul.f32 %v486, %v486
          %v491 = vmul.f32 %v487, %v487
          %v492 = vadd.f32 %v488, %v490
          %v493 = vadd.f32 %v489, %v491
          %494 = vst [vmem:[#allocation3] sm:$0xff] %v492
          %495 = vst [vmem:[#allocation3 + $0x8] sm:$0xff] %v493
        $region64: #{tpu_custom_call.1} parent=35 // pred_fallthru
          _
        // Predicated region
        $region65: #{tpu_custom_call.1} parent=35 // pred_check
          %p496 = pneg %p442
        $region66: #{tpu_custom_call.1} parent=35 // pred_check_branch
          %498 = sbr.rel (%p496) target = $region68
        $region67: #{tpu_custom_call.1} parent=35 // pred_region
          %v499 = vlaneseq
          %v500 = vshrl.u32 %v499, 7
          %vm501 = vcmp.eq.s32.totalorder %v500, 0
          %v502 = vld [vmem:[#allocation2] sm:$0xff]
          %v503 = vrot.slane %v502, 4
          %v504 = vadd.f32 %v502, %v503
          %v505 = vrot.slane %v504, 2
          %v506 = vadd.f32 %v504, %v505
          %v507 = vrot.slane %v506, 1
          %v508 = vadd.f32 %v506, %v507
          %v509 = vsel %vm501, %v508, 0.0
          %510 = vst [vmem:[%s403] sm:$0xff] %v509
          %v511 = vld [vmem:[#allocation3] sm:$0xff]
          %v512 = vld [vmem:[#allocation3 + $0x8] sm:$0xff]
          %v513 = vadd.f32 %v511, %v512
          %v514 = vrot.slane %v513, 4
          %v515 = vadd.f32 %v513, %v514
          %v516 = vrot.slane %v515, 2
          %v517 = vadd.f32 %v515, %v516
          %v518 = vrot.slane %v517, 1
          %v519 = vadd.f32 %v517, %v518
          %v520 = vsel %vm501, %v519, 0.0
          %521 = vst [vmem:[%s410] sm:$0xff] %v520
        $region68: #{tpu_custom_call.1} parent=35 // pred_fallthru
          _
        %s522 = sand.u32 %s177, 1
        %s523 = scalar_lea.sflag [#allocation6], %s522
        %s524 = sand.u32 %s177, 1
        %s525 = smul.addr %s524, 8
        %s526 = scalar_lea.vmem [#allocation10], %s525
        %s527 = sand.u32 %s203, 1
        %s528 = scalar_lea.sflag [#allocation12], %s527
        %s529 = sand.u32 %s203, 1
        %s530 = smul.addr %s529, 8
        %s531 = scalar_lea.vmem [#allocation11], %s530
        // Predicated region
        $region69: #{tpu_custom_call.1} parent=35 // pred_check
          %p532 = pneg %p187
        $region70: #{tpu_custom_call.1} parent=35 // pred_check_branch
          %534 = sbr.rel (%p532) target = $region72
        $region71: #{tpu_custom_call.1} parent=35 // pred_region
          %s536 = ssub.s32 128, 128
          %537 = vsyncadd %s523, %s536
          %s538 = smul.addr %s33, 128
          %s539 = scalar_lea.hbm %s4, %s538
          %s541 = sshll.u32 %s526, 4
          %s542 = int_to_ptr.vmem [resolvable:$true] %s541
          %544 = dma.vmem_to_hbm [thread:$0]  %s542, 128, %s539, %s523
        $region72: #{tpu_custom_call.1} parent=35 // pred_fallthru
          _
        // Predicated region
        $region73: #{tpu_custom_call.1} parent=35 // pred_check
          %p545 = pneg %p213
        $region74: #{tpu_custom_call.1} parent=35 // pred_check_branch
          %547 = sbr.rel (%p545) target = $region76
        $region75: #{tpu_custom_call.1} parent=35 // pred_region
          %s549 = ssub.s32 128, 128
          %550 = vsyncadd %s528, %s549
          %s551 = smul.addr %s33, 128
          %s552 = scalar_lea.hbm %s5, %s551
          %s554 = sshll.u32 %s531, 4
          %s555 = int_to_ptr.vmem [resolvable:$true] %s554
          %557 = dma.vmem_to_hbm [thread:$0]  %s555, 128, %s552, %s528
        $region76: #{tpu_custom_call.1} parent=35 // pred_fallthru
          _
      $region36: #{tpu_custom_call.1} parent=5 // pred_fallthru
        _
      %p558 = scmp.le.s32.totalorder 2, %s24
      // Predicated region
      $region77: #{tpu_custom_call.1} parent=5 // pred_check
        %p559 = pneg %p558
      $region78: #{tpu_custom_call.1} parent=5 // pred_check_branch
        %561 = sbr.rel (%p559) target = $region80
      $region79: #{tpu_custom_call.1} parent=5 // pred_region
        %s562 = ssub.s32 %s24, 2
        // Predicated region
        $region81: #{tpu_custom_call.1} parent=79 // pred_check
          %p563 = pneg %p193
        $region82: #{tpu_custom_call.1} parent=79 // pred_check_branch
          %565 = sbr.rel (%p563) target = $region84
        $region83: #{tpu_custom_call.1} parent=79 // pred_region
          %s566 = sand.u32 %s178, 1
          %s567 = scalar_lea.sflag [#allocation6], %s566
          %s568 = sand.u32 %s178, 1
          %s569 = smul.addr %s568, 8
          %s570 = scalar_lea.vmem [#allocation10], %s569
          %571 = dma.done %s567, 128
        $region84: #{tpu_custom_call.1} parent=79 // pred_fallthru
          _
        // Predicated region
        $region85: #{tpu_custom_call.1} parent=79 // pred_check
          %p572 = pneg %p219
        $region86: #{tpu_custom_call.1} parent=79 // pred_check_branch
          %574 = sbr.rel (%p572) target = $region88
        $region87: #{tpu_custom_call.1} parent=79 // pred_region
          %s575 = sand.u32 %s204, 1
          %s576 = scalar_lea.sflag [#allocation12], %s575
          %s577 = sand.u32 %s204, 1
          %s578 = smul.addr %s577, 8
          %s579 = scalar_lea.vmem [#allocation11], %s578
          %580 = dma.done %s576, 128
        $region88: #{tpu_custom_call.1} parent=79 // pred_fallthru
          _
      $region80: #{tpu_custom_call.1} parent=5 // pred_fallthru
        _
    $region6: #{tpu_custom_call.1} parent=1 // loop_footer
      %s28 = sadd.s32 1, %s24
    $region7: #{tpu_custom_call.1} parent=1 // loop_footer_branch
      %23 = sbr.rel target = $region3
    $region8: #{tpu_custom_call.1} parent=1 // loop_exit
      _
    %581 = vsyncpa [#allocation5], 1
    %s582 = scalar_lea.sflag [#allocation5], 1
    %583 = vsyncpa %s582, 1
    %584 = vsyncpa [#allocation8], 1
    %s585 = scalar_lea.sflag [#allocation8], 1
    %586 = vsyncpa %s585, 1
    %587 = vsyncpa [#allocation6], 1
    %s588 = scalar_lea.sflag [#allocation6], 1
    %589 = vsyncpa %s588, 1
    %590 = vsyncpa [#allocation12], 1
    %s591 = scalar_lea.sflag [#allocation12], 1
    %592 = vsyncpa %s591, 1

</llo_original>
